<compile_context>
chip_gen: v6e
topology: v6e:2x2x1
jax: 0.10.0
libtpu: 0.0.40
codegen_flags: <defaults>
</compile_context>

<pallas_src>
import functools

import jax
import jax.numpy as jnp
from jax import lax
from jax.experimental import pallas as pl
from jax.experimental.pallas import tpu as pltpu

KSIZE = 4
BN_EPS = 1e-5
LEAKY_SLOPE = 0.2
LANE = 128
ROW_ALIGN = 16  # block row granularity safe for bf16 (16,128) packing


def _round_up(x, m):
    return (x + m - 1) // m * m


def _cdiv(a, b):
    return (a + b - 1) // b


def _vmem_budget_bytes():
    """Generation-aware scoped-VMEM budget: ~75% of physical VMEM
    (96 MiB on v5e/v6e, 48 MiB on v7x). Conservative fallback if the HW
    query is unavailable."""
    cap = None
    try:
        cap = getattr(pltpu.get_tpu_info(), "vmem_capacity_bytes", None)
    except Exception:
        cap = None
    if not cap:
        cap = 64 << 20  # v7x-sized fallback -> 48 MiB budget, safe everywhere
    return int(cap) * 3 // 4


def _pick_tm_pass1(m, k, c_pad, budget_bytes, tm_max=1024):
    """Largest TM (multiple of 16, <= tm_max) whose pass-1 working set fits:
    bf16 patches double-buffered + bf16 y double-buffered + bf16 weight
    SINGLE-buffered (constant index_map) + tiny stats blocks."""
    tm = min(tm_max, _round_up(m, ROW_ALIGN))

    def usage(t):
        return (2 * t * k * 2          # patches (bf16), double-buffered
                + 2 * t * c_pad * 2    # y (bf16), double-buffered
                + 1 * k * c_pad * 2    # weight (bf16), single-buffered
                + 8 * c_pad * 4)       # stats blocks (tiny)

    while tm > ROW_ALIGN and usage(tm) > budget_bytes:
        tm = max(ROW_ALIGN, _round_up(tm // 2, ROW_ALIGN))
    return tm


def _pick_tm_pass2(m, c_pad, budget_bytes, tm_max=4096):
    """Pass 2 has no K-sized operands, so a much larger tile fits VMEM."""
    tm = min(tm_max, _round_up(m, ROW_ALIGN))

    def usage(t):
        return (2 * t * c_pad * 2      # y in (bf16), double-buffered
                + 2 * t * c_pad * 4    # out (f32), double-buffered
                + 8 * c_pad * 4)       # a, b

    while tm > ROW_ALIGN and usage(tm) > budget_bytes:
        tm = max(ROW_ALIGN, _round_up(tm // 2, ROW_ALIGN))
    return tm


# --------------------------------------------------------------------------
# im2col: (N, C, H, W) -> (N*Ho*Wo, C*k*k), feature order (ci, kh, kw).
# Done in bf16 so the XLA relayout only moves half the bytes.
# --------------------------------------------------------------------------
def _im2col_nchw(x, ksize, stride):
    N, C, H, W = x.shape
    Ho = (H - ksize) // stride + 1
    Wo = (W - ksize) // stride + 1
    cols = []
    for kh in range(ksize):
        for kw in range(ksize):
            cols.append(
                x[:, :,
                  kh:kh + stride * (Ho - 1) + 1:stride,
                  kw:kw + stride * (Wo - 1) + 1:stride])  # (N, C, Ho, Wo)
    p = jnp.stack(cols, axis=2)                 # (N, C, k*k, Ho, Wo)
    p = jnp.transpose(p, (0, 3, 4, 1, 2))       # (N, Ho, Wo, C, k*k)
    return p.reshape(N * Ho * Wo, C * ksize * ksize), Ho, Wo


# --------------------------------------------------------------------------
# Pass 1: conv matmul + BatchNorm statistics accumulation.
# --------------------------------------------------------------------------
def _conv_stats_kernel(p_ref, w_ref, y_ref, sum_ref, ssq_ref, *,
                       m_real, tm, tiles_per_core):
    p = pl.program_id(0)     # "parallel" core-split axis
    j = pl.program_id(1)     # "arbitrary" M-tile axis (stats accumulate)

    # MXU: bf16 operands, f32 accumulate kept in-register for the stats.
    y = jnp.dot(p_ref[...], w_ref[...], preferred_element_type=jnp.float32)
    # bf16 store halves the HBM round trip between the two passes.
    y_ref[...] = y.astype(y_ref.dtype)

    @pl.when(j == 0)
    def _():
        sum_ref[...] = jnp.zeros_like(sum_ref)
        ssq_ref[...] = jnp.zeros_like(ssq_ref)

    # Mask rows outside the real M: the partial last tile, and any fully
    # out-of-range tile whose index_map was clamped (odd tile count split
    # across the two cores).
    row0 = (p * tiles_per_core + j) * tm
    rows = row0 + lax.broadcasted_iota(jnp.int32, (tm, 1), 0)
    yv = jnp.where(rows < m_real, y, 0.0)
    sum_ref[...] += jnp.sum(yv, axis=0, keepdims=True)[None]
    ssq_ref[...] += jnp.sum(yv * yv, axis=0, keepdims=True)[None]


# --------------------------------------------------------------------------
# Pass 2: folded BatchNorm affine + LeakyReLU(0.2).
# --------------------------------------------------------------------------
def _bn_lrelu_kernel(y_ref, a_ref, b_ref, o_ref):
    z = y_ref[...].astype(jnp.float32) * a_ref[...] + b_ref[...]
    o_ref[...] = jnp.where(z >= 0, z, LEAKY_SLOPE * z)


def cnn_block_forward(x, weight, gamma, beta, stride=2,
                      channels_last_output=False):
    """x: (N, C_in, H, W) NCHW. weight: (C_out, C_in, 4, 4). gamma/beta: (C_out,).
    Returns f32 NCHW (PyTorch layout) or NHWC when channels_last_output=True
    (skips the final relayout; preferred when chaining blocks)."""
    N, C_in, H, W = x.shape
    C_out = weight.shape[0]

    # im2col in bf16 (half-width relayout), no padding along M.
    patches, Ho, Wo = _im2col_nchw(x.astype(jnp.bfloat16), KSIZE, stride)
    M, K = patches.shape

    C_pad = _round_up(C_out, LANE)            # lane-dense channel axis
    budget = _vmem_budget_bytes()

    TM = _pick_tm_pass1(M, K, C_pad, budget)
    n_tiles = _cdiv(M, TM)
    ncores = 2 if n_tiles > 1 else 1          # leading "parallel" axis (v7x)
    tiles_per_core = _cdiv(n_tiles, ncores)
    last_tile = n_tiles - 1

    w_mat = jnp.transpose(weight, (1, 2, 3, 0)).reshape(K, C_out)
    w_mat = jnp.pad(w_mat.astype(jnp.float32),
                    ((0, 0), (0, C_pad - C_out))).astype(jnp.bfloat16)
    gamma_p = jnp.pad(gamma.astype(jnp.float32).reshape(1, C_out),
                      ((0, 0), (0, C_pad - C_out)))
    beta_p = jnp.pad(beta.astype(jnp.float32).reshape(1, C_out),
                     ((0, 0), (0, C_pad - C_out)))

    def m_tile_map(p, j):
        # Clamp so a fully out-of-range tile (odd n_tiles split two ways)
        # revisits the last real tile; its stats contribution is masked
        # in-kernel, and the repeated y write is idempotent.
        return (jnp.minimum(p * tiles_per_core + j, last_tile), 0)

    flops1 = 2 * M * K * C_pad
    bytes1 = M * K * 2 + K * C_pad * 2 + M * C_pad * 2 + 2 * ncores * C_pad * 4

    y, csum, cssq = pl.pallas_call(
        functools.partial(_conv_stats_kernel, m_real=M, tm=TM,
                          tiles_per_core=tiles_per_core),
        out_shape=(
            jax.ShapeDtypeStruct((M, C_pad), jnp.bfloat16),        # y (bf16)
            jax.ShapeDtypeStruct((ncores, 1, C_pad), jnp.float32),  # per-core sum
            jax.ShapeDtypeStruct((ncores, 1, C_pad), jnp.float32),  # per-core ssq
        ),
        grid=(ncores, tiles_per_core),
        in_specs=[
            pl.BlockSpec((TM, K), m_tile_map),                      # patches tile
            pl.BlockSpec((K, C_pad), lambda p, j: (0, 0),
                         pipeline_mode=pl.Buffered(1)),             # resident weight
        ],
        out_specs=(
            pl.BlockSpec((TM, C_pad), m_tile_map),                  # y tile
            pl.BlockSpec((1, 1, C_pad), lambda p, j: (p, 0, 0)),    # sum acc
            pl.BlockSpec((1, 1, C_pad), lambda p, j: (p, 0, 0)),    # ssq acc
        ),
        compiler_params=pltpu.CompilerParams(
            dimension_semantics=("parallel", "arbitrary"),
            vmem_limit_bytes=budget),
        cost_estimate=pl.CostEstimate(
            flops=flops1, transcendentals=0, bytes_accessed=bytes1),
    )(patches, w_mat)

    # ---------------- per-channel BN folding (tiny, in the XLA glue) -------
    csum = jnp.sum(csum, axis=0).reshape(1, C_pad)
    cssq = jnp.sum(cssq, axis=0).reshape(1, C_pad)
    inv_m = jnp.float32(1.0 / M)
    mean = csum * inv_m
    var = jnp.maximum(cssq * inv_m - mean * mean, 0.0)   # biased variance
    a = gamma_p * lax.rsqrt(var + BN_EPS)                # (1, C_pad)
    b = beta_p - mean * a                                # (1, C_pad)

    # ---------------- pass 2: normalize + LeakyReLU (larger, independent tile)
    TM2 = _pick_tm_pass2(M, C_pad, budget)
    n_tiles2 = _cdiv(M, TM2)

    out_flat = pl.pallas_call(
        _bn_lrelu_kernel,
        out_shape=jax.ShapeDtypeStruct((M, C_pad), jnp.float32),
        grid=(n_tiles2,),
        in_specs=[
            pl.BlockSpec((TM2, C_pad), lambda i: (i, 0)),
            pl.BlockSpec((1, C_pad), lambda i: (0, 0)),
            pl.BlockSpec((1, C_pad), lambda i: (0, 0)),
        ],
        out_specs=pl.BlockSpec((TM2, C_pad), lambda i: (i, 0)),
        compiler_params=pltpu.CompilerParams(
            dimension_semantics=("parallel",),
            vmem_limit_bytes=budget),
        cost_estimate=pl.CostEstimate(
            flops=3 * M * C_pad, transcendentals=0,
            bytes_accessed=M * C_pad * (2 + 4) + 2 * C_pad * 4),
    )(y, a, b)

    out = out_flat[:, :C_out].reshape(N, Ho, Wo, C_out)
    if channels_last_output:
        return out                       # NHWC: skips the final relayout
    return jnp.transpose(out, (0, 3, 1, 2))   # PyTorch NCHW


# --------------------------------------------------------------------------
# Pure-JAX reference (bf16 conv operands like the MXU path, f32 elsewhere).
# --------------------------------------------------------------------------
def _reference(x, weight, gamma, beta, stride=2):
    xb = x.astype(jnp.bfloat16).astype(jnp.float32)
    wb = weight.astype(jnp.bfloat16).astype(jnp.float32)
    y = lax.conv_general_dilated(
        xb, wb, window_strides=(stride, stride), padding="VALID",
        dimension_numbers=("NCHW", "OIHW", "NCHW"))
    mean = jnp.mean(y, axis=(0, 2, 3), keepdims=True)
    var = jnp.mean((y - mean) ** 2, axis=(0, 2, 3), keepdims=True)  # biased
    y_hat = (y - mean) * lax.rsqrt(var + BN_EPS)
    y_bn = y_hat * gamma.reshape(1, -1, 1, 1) + beta.reshape(1, -1, 1, 1)
    return jnp.where(y_bn >= 0, y_bn, LEAKY_SLOPE * y_bn)


if __name__ == "__main__":
    key = jax.random.PRNGKey(0)
    k_x, k_w, k_g, k_b = jax.random.split(key, 4)

    N, C_in, H, W = 2, 4, 16, 16
    C_out, stride = 8, 2

    x = jax.random.normal(k_x, (N, C_in, H, W), dtype=jnp.float32)
    weight = jax.random.normal(k_w, (C_out, C_in, KSIZE, KSIZE),
                               dtype=jnp.float32) * 0.1
    gamma = 1.0 + 0.1 * jax.random.normal(k_g, (C_out,), dtype=jnp.float32)
    beta = 0.1 * jax.random.normal(k_b, (C_out,), dtype=jnp.float32)

    out = cnn_block_forward(x, weight, gamma, beta, stride=stride)
    out = jax.block_until_ready(out)

    ref = jax.block_until_ready(_reference(x, weight, gamma, beta, stride=stride))
    Ho = (H - KSIZE) // stride + 1
    Wo = (W - KSIZE) // stride + 1
    assert out.shape == (N, C_out, Ho, Wo)
    # Tolerance accounts for the bf16 y intermediate between the two passes
    # (~2^-9 relative on y, amplified by the BN scale); conv stats themselves
    # are accumulated in f32.
    assert jnp.allclose(out, ref, atol=2e-2, rtol=2e-2), "mismatch vs JAX reference"

    print("KERNEL_OK")
</pallas_src>

<mosaic_0001>
module attributes {stable_mosaic.version = 11 : i64} {
  func.func @_conv_stats_kernel(%arg0: i32, %arg1: i32, %arg2: memref<112x64xbf16, #tpu.memory_space<vmem>>, %arg3: memref<64x128xbf16, #tpu.memory_space<vmem>>, %arg4: memref<112x128xbf16, #tpu.memory_space<vmem>>, %arg5: memref<1x1x128xf32, #tpu.memory_space<vmem>>, %arg6: memref<1x1x128xf32, #tpu.memory_space<vmem>>) attributes {dimension_semantics = [#tpu.dimension_semantics<parallel>, #tpu.dimension_semantics<arbitrary>], iteration_bounds = array<i64: 1, 1>, scalar_prefetch = 0 : i64, scratch_operands = 0 : i64, tpu.core_type = #tpu.core_type<tc>, window_params = [{transform_indices = @transform_0, window_bounds = array<i64: 112, 64>}, {pipeline_mode = #tpu.pipeline_mode<synchronous>, transform_indices = @transform_1, window_bounds = array<i64: 64, 128>}, {transform_indices = @transform_2, window_bounds = array<i64: 112, 128>}, {transform_indices = @transform_3, window_bounds = array<i64: 1, 1, 128>}, {transform_indices = @transform_4, window_bounds = array<i64: 1, 1, 128>}]} {
    %c0 = arith.constant 0 : index
    %c0_0 = arith.constant 0 : index
    %0 = vector.load %arg2[%c0, %c0_0] : memref<112x64xbf16, #tpu.memory_space<vmem>>, vector<112x64xbf16>
    %c0_1 = arith.constant 0 : index
    %c0_2 = arith.constant 0 : index
    %1 = vector.load %arg3[%c0_1, %c0_2] : memref<64x128xbf16, #tpu.memory_space<vmem>>, vector<64x128xbf16>
    %cst = arith.constant dense<0.000000e+00> : vector<112x128xf32>
    %2 = tpu.matmul %0, %1, %cst {dimension_numbers = #tpu.dot_dimension_numbers<[1], [0], [0], [1], [0, 0, 1, 1], [], []>} : vector<112x64xbf16>, vector<64x128xbf16>, vector<112x128xf32> -> vector<112x128xf32>
    %3 = arith.truncf %2 : vector<112x128xf32> to vector<112x128xbf16>
    %c0_3 = arith.constant 0 : index
    %c0_4 = arith.constant 0 : index
    %4 = vector.load %arg4[%c0_3, %c0_4] : memref<112x128xbf16, #tpu.memory_space<vmem>>, vector<112x128xbf16>
    tpu.vector_store %arg4[%c0_3, %c0_4], %3 {strides = array<i32>} : memref<112x128xbf16, #tpu.memory_space<vmem>>, vector<112x128xbf16>,
    %c0_i32 = arith.constant 0 : i32
    %5 = arith.cmpi eq, %arg1, %c0_i32 : i32
    %6 = arith.extui %5 : i1 to i32
    %c0_i32_5 = arith.constant 0 : i32
    %7 = arith.cmpi ne, %6, %c0_i32_5 : i32
    scf.if %7 {
      %cst_21 = arith.constant 0.000000e+00 : f32
      %33 = vector.broadcast %cst_21 : f32 to vector<1x1x128xf32>
      %c0_22 = arith.constant 0 : index
      %c0_23 = arith.constant 0 : index
      %c0_24 = arith.constant 0 : index
      %34 = vector.load %arg5[%c0_22, %c0_23, %c0_24] : memref<1x1x128xf32, #tpu.memory_space<vmem>>, vector<1x1x128xf32>
      tpu.vector_store %arg5[%c0_22, %c0_23, %c0_24], %33 {strides = array<i32>} : memref<1x1x128xf32, #tpu.memory_space<vmem>>, vector<1x1x128xf32>,
      %cst_25 = arith.constant 0.000000e+00 : f32
      %35 = vector.broadcast %cst_25 : f32 to vector<1x1x128xf32>
      %c0_26 = arith.constant 0 : index
      %c0_27 = arith.constant 0 : index
      %c0_28 = arith.constant 0 : index
      %36 = vector.load %arg6[%c0_26, %c0_27, %c0_28] : memref<1x1x128xf32, #tpu.memory_space<vmem>>, vector<1x1x128xf32>
      tpu.vector_store %arg6[%c0_26, %c0_27, %c0_28], %35 {strides = array<i32>} : memref<1x1x128xf32, #tpu.memory_space<vmem>>, vector<1x1x128xf32>,
    } else {
    }
    %c1_i32 = arith.constant 1 : i32
    %8 = arith.muli %arg0, %c1_i32 : i32
    %9 = arith.addi %8, %arg1 : i32
    %c112_i32 = arith.constant 112 : i32
    %10 = arith.muli %9, %c112_i32 : i32
    %11 = tpu.iota {dimensions = array<i32: 0>} : vector<112x1xi32>
    %12 = vector.broadcast %10 : i32 to vector<112x1xi32>
    %13 = arith.addi %12, %11 : vector<112x1xi32>
    %c98_i32 = arith.constant 98 : i32
    %14 = vector.broadcast %c98_i32 : i32 to vector<112x1xi32>
    %15 = arith.cmpi slt, %13, %14 : vector<112x1xi32>
    %cst_6 = arith.constant 0.000000e+00 : f32
    %16 = vector.shape_cast %15 : vector<112x1xi1> to vector<112x1xi1>
    %17 = vector.broadcast %16 : vector<112x1xi1> to vector<112x128xi1>
    %18 = vector.broadcast %cst_6 : f32 to vector<112x128xf32>
    %19 = arith.select %17, %2, %18 : vector<112x128xi1>, vector<112x128xf32>
    %c0_7 = arith.constant 0 : index
    %c0_8 = arith.constant 0 : index
    %c0_9 = arith.constant 0 : index
    %20 = vector.load %arg5[%c0_7, %c0_8, %c0_9] : memref<1x1x128xf32, #tpu.memory_space<vmem>>, vector<1x1x128xf32>
    %cst_10 = arith.constant dense<0.000000e+00> : vector<128xf32>
    %21 = vector.multi_reduction <add>, %19, %cst_10 [0] : vector<112x128xf32> to vector<128xf32>
    %22 = vector.shape_cast %21 : vector<128xf32> to vector<1x128xf32>
    %23 = vector.shape_cast %22 : vector<1x128xf32> to vector<1x1x128xf32>
    %24 = arith.addf %20, %23 : vector<1x1x128xf32>
    %c0_11 = arith.constant 0 : index
    %c0_12 = arith.constant 0 : index
    %c0_13 = arith.constant 0 : index
    %25 = vector.load %arg5[%c0_11, %c0_12, %c0_13] : memref<1x1x128xf32, #tpu.memory_space<vmem>>, vector<1x1x128xf32>
    tpu.vector_store %arg5[%c0_11, %c0_12, %c0_13], %24 {strides = array<i32>} : memref<1x1x128xf32, #tpu.memory_space<vmem>>, vector<1x1x128xf32>,
    %c0_14 = arith.constant 0 : index
    %c0_15 = arith.constant 0 : index
    %c0_16 = arith.constant 0 : index
    %26 = vector.load %arg6[%c0_14, %c0_15, %c0_16] : memref<1x1x128xf32, #tpu.memory_space<vmem>>, vector<1x1x128xf32>
    %27 = arith.mulf %19, %19 : vector<112x128xf32>
    %cst_17 = arith.constant dense<0.000000e+00> : vector<128xf32>
    %28 = vector.multi_reduction <add>, %27, %cst_17 [0] : vector<112x128xf32> to vector<128xf32>
    %29 = vector.shape_cast %28 : vector<128xf32> to vector<1x128xf32>
    %30 = vector.shape_cast %29 : vector<1x128xf32> to vector<1x1x128xf32>
    %31 = arith.addf %26, %30 : vector<1x1x128xf32>
    %c0_18 = arith.constant 0 : index
    %c0_19 = arith.constant 0 : index
    %c0_20 = arith.constant 0 : index
    %32 = vector.load %arg6[%c0_18, %c0_19, %c0_20] : memref<1x1x128xf32, #tpu.memory_space<vmem>>, vector<1x1x128xf32>
    tpu.vector_store %arg6[%c0_18, %c0_19, %c0_20], %31 {strides = array<i32>} : memref<1x1x128xf32, #tpu.memory_space<vmem>>, vector<1x1x128xf32>,
    return
  }
  func.func @transform_0(%arg0: i32, %arg1: i32) -> (i32, i32) {
    %c1_i32 = arith.constant 1 : i32
    %0 = arith.muli %arg0, %c1_i32 : i32
    %1 = arith.addi %0, %arg1 : i32
    %c0_i32 = arith.constant 0 : i32
    %2 = arith.minsi %1, %c0_i32 : i32
    %c0_i32_0 = arith.constant 0 : i32
    %c0_i32_1 = arith.constant 0 : i32
    return %2, %c0_i32_0 : i32, i32
  }
  func.func @transform_1(%arg0: i32, %arg1: i32) -> (i32, i32) {
    %c0_i32 = arith.constant 0 : i32
    %c0_i32_0 = arith.constant 0 : i32
    %c0_i32_1 = arith.constant 0 : i32
    return %c0_i32, %c0_i32_0 : i32, i32
  }
  func.func @transform_2(%arg0: i32, %arg1: i32) -> (i32, i32) {
    %c1_i32 = arith.constant 1 : i32
    %0 = arith.muli %arg0, %c1_i32 : i32
    %1 = arith.addi %0, %arg1 : i32
    %c0_i32 = arith.constant 0 : i32
    %2 = arith.minsi %1, %c0_i32 : i32
    %c0_i32_0 = arith.constant 0 : i32
    %c0_i32_1 = arith.constant 0 : i32
    return %2, %c0_i32_0 : i32, i32
  }
  func.func @transform_3(%arg0: i32, %arg1: i32) -> (i32, i32, i32) {
    %c0_i32 = arith.constant 0 : i32
    %c0_i32_0 = arith.constant 0 : i32
    %c0_i32_1 = arith.constant 0 : i32
    return %arg0, %c0_i32, %c0_i32_0 : i32, i32, i32
  }
  func.func @transform_4(%arg0: i32, %arg1: i32) -> (i32, i32, i32) {
    %c0_i32 = arith.constant 0 : i32
    %c0_i32_0 = arith.constant 0 : i32
    %c0_i32_1 = arith.constant 0 : i32
    return %arg0, %c0_i32, %c0_i32_0 : i32, i32, i32
  }
}

</mosaic_0001>

<llo_original>
// kernel: tpu_custom_call.1
$region0: #{tpu_custom_call.1}
  #allocation0 [shape = 'u32[]', space=smem, size = 0x4, offset = 0x4, fixed_abs, tag = 'smem constant byte address 0x4 - core index']
  #allocation1 [shape = 'u32[144,128]{1,0:T(1,128)}', space=vmem, size = 0x12000, scoped, tag = 'internal scratch']
  %s0 = inlined_call_operand.vmem [shape: bf16[98,64], index: 0, kind: input, shape index: {}]
  %s1 = inlined_call_operand.vmem [shape: bf16[64,128], index: 1, kind: input, shape index: {}]
  %s2 = inlined_call_operand.hbm [shape: bf16[98,128], index: 2, kind: output, shape index: {0}]
  %s3 = inlined_call_operand.hbm [shape: f32[1,1,128], index: 3, kind: output, shape index: {1}]
  %s4 = inlined_call_operand.hbm [shape: f32[1,1,128], index: 4, kind: output, shape index: {2}]
  %5 = xla_tuple %s2, %s3, %s4
  %s6 = sld [smem:[#allocation0]]
  $region38: #{tpu_custom_call.1} parent=0
    _
  %s8 = ssub.s32 1, %s6
  %s9 = scalar_select 0, %s8, %s6
  $region1: #{tpu_custom_call.1} parent=0
    #allocation2 [shape = 'u8[28672]{0}', space=vmem, size = 0x7000, scoped, tag = 'output window, operand 0, single buffered']
    #allocation3 [shape = 's32[1]{0}', space=sflag, size = 0x4, scoped, tag = 'scoped memory for tpu_custom_call.1']
    #allocation4 [shape = 'u8[512]{0}', space=vmem, size = 0x400, scoped, tag = 'output window, operand 1, single buffered']
    #allocation5 [shape = 's32[1]{0}', space=sflag, size = 0x4, scoped, tag = 'scoped memory for tpu_custom_call.1']
    #allocation6 [shape = 'u8[512]{0}', space=vmem, size = 0x400, scoped, tag = 'output window, operand 2, single buffered']
    %10 = vsyncpa [#allocation3], 0
    %11 = vsyncpa [#allocation5], 0
    // Predicated region
    $region2: #{tpu_custom_call.1} parent=1 // pred_check
      _
    $region3: #{tpu_custom_call.1} parent=1 // pred_check_branch
      %13 = sbr.rel (0) target = $region5
    $region4: #{tpu_custom_call.1} parent=1 // pred_region
      %s14 = sadd.s32 0, 0
      %p15 = scmp.lt.s32.totalorder %s14, 0
      %s16 = scalar_select %p15, %s14, 0
      %s17 = smul.u32 14, %s16
      %s18 = ssub.s32 13, %s17
      %s19 = smul.u32 64, %s18
      %p20 = scmp.lt.s32.totalorder %s17, 12
      %s21 = scalar_select %p20, %s17, 12
      %s22 = smul.addr %s21, 4
      %s23 = scalar_lea.vmem %s0, %s22
      %s24 = sadd.s32 0, 0
      %p25 = scmp.lt.s32.totalorder %s24, 0
      %s26 = scalar_select %p25, %s24, 0
      %s27 = smul.u32 14, %s26
      %s28 = ssub.s32 13, %s27
      %s29 = smul.u32 64, %s28
    $region5: #{tpu_custom_call.1} parent=1 // pred_fallthru
      _
    // Predicated region
    $region6: #{tpu_custom_call.1} parent=1 // pred_check
      _
    $region7: #{tpu_custom_call.1} parent=1 // pred_check_branch
      %31 = sbr.rel (0) target = $region9
    $region8: #{tpu_custom_call.1} parent=1 // pred_region
      _
    $region9: #{tpu_custom_call.1} parent=1 // pred_fallthru
      _
    %s32 = sadd.s32 0, 0
    %p33 = scmp.lt.s32.totalorder %s32, 0
    %s34 = scalar_select %p33, %s32, 0
    %s35 = smul.u32 14, %s34
    %s36 = ssub.s32 13, %s35
    %s37 = smul.u32 64, %s36
    %p38 = scmp.lt.s32.totalorder %s35, 12
    %s39 = scalar_select %p38, %s35, 12
    %s40 = smul.addr %s39, 4
    %s41 = scalar_lea.vmem %s0, %s40
    %s42 = sadd.s32 0, 0
    %p43 = scmp.lt.s32.totalorder %s42, 0
    %s44 = scalar_select %p43, %s42, 0
    %s45 = smul.u32 14, %s44
    %s46 = ssub.s32 13, %s45
    %s47 = smul.u32 64, %s46
    %p48 = scmp.lt.s32.totalorder %s45, 12
    %s49 = scalar_select %p48, %s45, 12
    %s50 = smul.addr %s49, 4
    %s51 = scalar_lea.vmem %s0, %s50
    %s52 = sadd.s32 0, 0
    %p53 = scmp.lt.s32.totalorder %s52, 0
    %s54 = scalar_select %p53, %s52, 0
    %s55 = smul.u32 14, %s54
    %s56 = ssub.s32 13, %s55
    %s57 = smul.u32 64, %s56
    %s58 = sadd.s32 0, 0
    %p59 = scmp.lt.s32.totalorder %s58, 0
    %s60 = scalar_select %p59, %s58, 0
    %s61 = smul.u32 14, %s60
    %s62 = ssub.s32 13, %s61
    %s63 = smul.u32 64, %s62
    %v65 = vld [vmem:[%s51] sm:$0xf]
    %v66 = vld [vmem:[%s51 + $0x4] sm:$0xf]
    %v67 = vld [vmem:[%s51 + $0x8] sm:$0xf]
    %v68 = vld [vmem:[%s51 + $0xc] sm:$0xf]
    %v69 = vld [vmem:[%s51 + $0x10] sm:$0xf]
    %v70 = vld [vmem:[%s51 + $0x14] sm:$0xf]
    %v71 = vld [vmem:[%s51 + $0x18] sm:$0xf]
    %v72 = vld [vmem:[%s51 + $0x1c] sm:$0xf]
    %v73 = vld [vmem:[%s51 + $0x20] sm:$0xf]
    %v74 = vld [vmem:[%s51 + $0x24] sm:$0xf]
    %v75 = vld [vmem:[%s51 + $0x28] sm:$0xf]
    %v76 = vld [vmem:[%s51 + $0x2c] sm:$0xf]
    %v77 = vld [vmem:[%s51 + $0x30] sm:$0xf]
    %v78 = vld [vmem:[%s51 + $0x34] sm:$0xf]
    %v79 = vld [vmem:[%s1] sm:$0xf]
    %v80 = vld [vmem:[%s1 + $0x4] sm:$0xf]
    %v81 = vld [vmem:[%s1 + $0x8] sm:$0xf]
    %v82 = vld [vmem:[%s1 + $0xc] sm:$0xf]
    %v83 = vld [vmem:[%s1 + $0x10] sm:$0xf]
    %v84 = vld [vmem:[%s1 + $0x14] sm:$0xf]
    %v85 = vld [vmem:[%s1 + $0x18] sm:$0xf]
    %v86 = vld [vmem:[%s1 + $0x1c] sm:$0xf]
    %v101 = vunpack.c.l.b16 %v65
    %v102 = vunpack.c.l.b16 %v66
    %v103 = vunpack.c.l.b16 %v67
    %v104 = vunpack.c.l.b16 %v68
    %v105 = vunpack.c.l.b16 %v69
    %v106 = vunpack.c.l.b16 %v70
    %v107 = vunpack.c.l.b16 %v71
    %v108 = vunpack.c.l.b16 %v72
    %v109 = vunpack.c.l.b16 %v73
    %v110 = vunpack.c.l.b16 %v74
    %v111 = vunpack.c.l.b16 %v75
    %v112 = vunpack.c.l.b16 %v76
    %v113 = vunpack.c.l.b16 %v77
    %v114 = vunpack.c.l.b16 %v78
    %v115 = vpack.c.b16 %v102, %v101
    %v116 = vpack.c.b16 %v104, %v103
    %v117 = vpack.c.b16 %v106, %v105
    %v118 = vpack.c.b16 %v108, %v107
    %v119 = vpack.c.b16 %v110, %v109
    %v120 = vpack.c.b16 %v112, %v111
    %v121 = vpack.c.b16 %v114, %v113
    %v130 = vunpack.c.l.b16 %v79
    %v131 = vunpack.c.l.b16 %v80
    %v132 = vunpack.c.l.b16 %v81
    %v133 = vunpack.c.l.b16 %v82
    %v134 = vunpack.c.l.b16 %v83
    %v135 = vunpack.c.l.b16 %v84
    %v136 = vunpack.c.l.b16 %v85
    %v137 = vunpack.c.l.b16 %v86
    %v138 = vpack.c.b16 %v131, %v130
    %v139 = vpack.c.b16 %v133, %v132
    %v140 = vpack.c.b16 %v135, %v134
    %v141 = vpack.c.b16 %v137, %v136
    %vm146 = vcmask 523264
    %v148 = vsel %vm146, %v115, 0
    %v151 = vsel %vm146, %v116, 0
    %v154 = vsel %vm146, %v117, 0
    %v157 = vsel %vm146, %v118, 0
    %v160 = vsel %vm146, %v119, 0
    %v163 = vsel %vm146, %v120, 0
    %v166 = vsel %vm146, %v121, 0
    %168 = vmatprep.subr.bf16.mxu0 0
    %169 = vmatpush1.bf16.msra.mxu0 0
    %170 = vmatprep.subr.bf16.mxu0 0
    %171 = vmatpush1.bf16.msra.mxu0 0
    %172 = vmatprep.subr.bf16.mxu0 0
    %173 = vmatpush1.bf16.msra.mxu0 0
    %174 = vmatprep.subr.bf16.mxu0 0
    %175 = vmatpush1.bf16.msra.mxu0 0
    %176 = vmatprep.subr.bf16.mxu0 0
    %177 = vmatpush1.bf16.msra.mxu0 %v141
    %178 = vmatprep.subr.bf16.mxu0 0
    %179 = vmatpush1.bf16.msra.mxu0 %v140
    %180 = vmatprep.subr.bf16.mxu0 0
    %181 = vmatpush1.bf16.msra.mxu0 %v139
    %182 = vmatprep.subr.bf16.mxu0 0
    %183 = vmatpush1.bf16.msra.mxu0 %v138
    %184 = vmatprep.subr.bf16.mxu0 0
    %185 = vmatpush2.bf16.msra.mxu0 0
    %186 = vmatprep.subr.bf16.mxu0 0
    %187 = vmatpush2.bf16.msra.mxu0 0
    %188 = vmatprep.subr.bf16.mxu0 0
    %189 = vmatpush2.bf16.msra.mxu0 0
    %190 = vmatprep.subr.bf16.mxu0 0
    %191 = vmatpush2.bf16.msra.mxu0 0
    %192 = vmatprep.subr.bf16.mxu0 0
    %193 = vmatpush2.bf16.msra.mxu0 0
    %194 = vmatprep.subr.bf16.mxu0 0
    %195 = vmatpush2.bf16.msra.mxu0 0
    %196 = vmatprep.subr.bf16.mxu0 0
    %197 = vmatpush2.bf16.msra.mxu0 0
    %198 = vmatprep.subr.bf16.mxu0 0
    %199 = vmatpush2.bf16.msra.mxu0 0
    %200 = vmatprep.mubr.bf16.mxu0 0
    %201 = vmatmul.mubr.bf16.gmra.mxu0 %v148
    %v202 = vpop.f32.mrf.mxu0
    %v203 = vadd.f32 0.0, %v202
    %v204 = vpop.f32.mrf.mxu0
    %v205 = vpop.f32.mrf.mxu0
    %v206 = vadd.f32 0.0, %v205
    %v207 = vpop.f32.mrf.mxu0
    %208 = vmatprep.mubr.bf16.mxu0 0
    %209 = vmatmul.mubr.bf16.gmra.mxu0 %v151
    %v210 = vpop.f32.mrf.mxu0
    %v211 = vadd.f32 0.0, %v210
    %v212 = vpop.f32.mrf.mxu0
    %v213 = vpop.f32.mrf.mxu0
    %v214 = vadd.f32 0.0, %v213
    %v215 = vpop.f32.mrf.mxu0
    %216 = vmatprep.mubr.bf16.mxu0 0
    %217 = vmatmul.mubr.bf16.gmra.mxu0 %v154
    %v218 = vpop.f32.mrf.mxu0
    %v219 = vadd.f32 0.0, %v218
    %v220 = vpop.f32.mrf.mxu0
    %v221 = vpop.f32.mrf.mxu0
    %v222 = vadd.f32 0.0, %v221
    %v223 = vpop.f32.mrf.mxu0
    %224 = vmatprep.mubr.bf16.mxu0 0
    %225 = vmatmul.mubr.bf16.gmra.mxu0 %v157
    %v226 = vpop.f32.mrf.mxu0
    %v227 = vadd.f32 0.0, %v226
    %v228 = vpop.f32.mrf.mxu0
    %v229 = vpop.f32.mrf.mxu0
    %v230 = vadd.f32 0.0, %v229
    %v231 = vpop.f32.mrf.mxu0
    %232 = vmatprep.mubr.bf16.mxu0 0
    %233 = vmatmul.mubr.bf16.gmra.mxu0 %v160
    %v234 = vpop.f32.mrf.mxu0
    %v235 = vadd.f32 0.0, %v234
    %v236 = vpop.f32.mrf.mxu0
    %v237 = vpop.f32.mrf.mxu0
    %v238 = vadd.f32 0.0, %v237
    %v239 = vpop.f32.mrf.mxu0
    %240 = vmatprep.mubr.bf16.mxu0 0
    %241 = vmatmul.mubr.bf16.gmra.mxu0 %v163
    %v242 = vpop.f32.mrf.mxu0
    %v243 = vadd.f32 0.0, %v242
    %v244 = vpop.f32.mrf.mxu0
    %v245 = vpop.f32.mrf.mxu0
    %v246 = vadd.f32 0.0, %v245
    %v247 = vpop.f32.mrf.mxu0
    %248 = vmatprep.mubr.bf16.mxu0 0
    %249 = vmatmul.mubr.bf16.gmra.mxu0 %v166
    %v250 = vpop.f32.mrf.mxu0
    %v251 = vadd.f32 0.0, %v250
    %v252 = vpop.f32.mrf.mxu0
    %v253 = vpop.f32.mrf.mxu0
    %v254 = vadd.f32 0.0, %v253
    %v255 = vpop.f32.mrf.mxu0
    %256 = vdwg.mxu0
    %v257 = vpack.c.bf16 %v206, %v203
    %v258 = vpack.c.bf16 %v214, %v211
    %v259 = vpack.c.bf16 %v222, %v219
    %v260 = vpack.c.bf16 %v230, %v227
    %v261 = vpack.c.bf16 %v238, %v235
    %v262 = vpack.c.bf16 %v246, %v243
    %v263 = vpack.c.bf16 %v254, %v251
    %v271 = vunpack.c.l.b16 %v257
    %v272 = vunpack.c.h.b16 %v257
    %v273 = vunpack.c.l.b16 %v258
    %v274 = vunpack.c.h.b16 %v258
    %v275 = vunpack.c.l.b16 %v259
    %v276 = vunpack.c.h.b16 %v259
    %v277 = vunpack.c.l.b16 %v260
    %v278 = vunpack.c.h.b16 %v260
    %v279 = vunpack.c.l.b16 %v261
    %v280 = vunpack.c.h.b16 %v261
    %v281 = vunpack.c.l.b16 %v262
    %v282 = vunpack.c.h.b16 %v262
    %v283 = vunpack.c.l.b16 %v263
    %v284 = vunpack.c.h.b16 %v263
    %v285 = vpack.c.b16 %v271, %v271
    %v286 = vpack.c.b16 %v272, %v272
    %v287 = vpack.c.b16 %v273, %v273
    %v288 = vpack.c.b16 %v274, %v274
    %v289 = vpack.c.b16 %v275, %v275
    %v290 = vpack.c.b16 %v276, %v276
    %v291 = vpack.c.b16 %v277, %v277
    %v292 = vpack.c.b16 %v278, %v278
    %v293 = vpack.c.b16 %v279, %v279
    %v294 = vpack.c.b16 %v280, %v280
    %v295 = vpack.c.b16 %v281, %v281
    %v296 = vpack.c.b16 %v282, %v282
    %v297 = vpack.c.b16 %v283, %v283
    %v298 = vpack.c.b16 %v284, %v284
    %313 = vst [vmem:[#allocation2] sm:$0xf] %v285
    %314 = vst [vmem:[#allocation2 + $0x4] sm:$0xf] %v286
    %315 = vst [vmem:[#allocation2 + $0x8] sm:$0xf] %v287
    %316 = vst [vmem:[#allocation2 + $0xc] sm:$0xf] %v288
    %317 = vst [vmem:[#allocation2 + $0x10] sm:$0xf] %v289
    %318 = vst [vmem:[#allocation2 + $0x14] sm:$0xf] %v290
    %319 = vst [vmem:[#allocation2 + $0x18] sm:$0xf] %v291
    %320 = vst [vmem:[#allocation2 + $0x1c] sm:$0xf] %v292
    %321 = vst [vmem:[#allocation2 + $0x20] sm:$0xf] %v293
    %322 = vst [vmem:[#allocation2 + $0x24] sm:$0xf] %v294
    %323 = vst [vmem:[#allocation2 + $0x28] sm:$0xf] %v295
    %324 = vst [vmem:[#allocation2 + $0x2c] sm:$0xf] %v296
    %325 = vst [vmem:[#allocation2 + $0x30] sm:$0xf] %v297
    %326 = vst [vmem:[#allocation2 + $0x34] sm:$0xf] %v298
    %p327 = scmp.eq.s32.totalorder 0, 0
    // Predicated region
    $region10: #{tpu_custom_call.1} parent=1 // pred_check
      %p328 = pneg %p327
    $region11: #{tpu_custom_call.1} parent=1 // pred_check_branch
      %330 = sbr.rel (%p328) target = $region13
    $region12: #{tpu_custom_call.1} parent=1 // pred_region
      %331 = vst [vmem:[#allocation4] sm:$0x1] 0.0
      %332 = vst [vmem:[#allocation6] sm:$0x1] 0.0
    $region13: #{tpu_custom_call.1} parent=1 // pred_fallthru
      _
    %s333 = sadd.s32 0, 0
    %s334 = smul.u32 %s333, 112
    %v335 = vlaneseq
    %v336 = vshrl.u32 %v335, 7
    %v337 = vadd.s32 %v336, 8
    %v338 = vadd.s32 %v336, 16
    %v339 = vadd.s32 %v336, 24
    %v340 = vadd.s32 %v336, 32
    %v341 = vadd.s32 %v336, 40
    %v342 = vadd.s32 %v336, 48
    %v343 = vadd.s32 %v336, 56
    %v344 = vadd.s32 %v336, 64
    %v345 = vadd.s32 %v336, 72
    %v346 = vadd.s32 %v336, 80
    %v347 = vadd.s32 %v336, 88
    %v348 = vadd.s32 %v336, 96
    %v349 = vadd.s32 %v336, 104
    %v350 = vstv %s334
    %v351 = vadd.s32 %v350, %v336
    %v352 = vadd.s32 %v350, %v337
    %v353 = vadd.s32 %v350, %v338
    %v354 = vadd.s32 %v350, %v339
    %v355 = vadd.s32 %v350, %v340
    %v356 = vadd.s32 %v350, %v341
    %v357 = vadd.s32 %v350, %v342
    %v358 = vadd.s32 %v350, %v343
    %v359 = vadd.s32 %v350, %v344
    %v360 = vadd.s32 %v350, %v345
    %v361 = vadd.s32 %v350, %v346
    %v362 = vadd.s32 %v350, %v347
    %v363 = vadd.s32 %v350, %v348
    %v364 = vadd.s32 %v350, %v349
    %vm365 = vcmp.lt.s32.totalorder %v351, 98
    %vm366 = vcmp.lt.s32.totalorder %v352, 98
    %vm367 = vcmp.lt.s32.totalorder %v353, 98
    %vm368 = vcmp.lt.s32.totalorder %v354, 98
    %vm369 = vcmp.lt.s32.totalorder %v355, 98
    %vm370 = vcmp.lt.s32.totalorder %v356, 98
    %vm371 = vcmp.lt.s32.totalorder %v357, 98
    %vm372 = vcmp.lt.s32.totalorder %v358, 98
    %vm373 = vcmp.lt.s32.totalorder %v359, 98
    %vm374 = vcmp.lt.s32.totalorder %v360, 98
    %vm375 = vcmp.lt.s32.totalorder %v361, 98
    %vm376 = vcmp.lt.s32.totalorder %v362, 98
    %vm377 = vcmp.lt.s32.totalorder %v363, 98
    %vm378 = vcmp.lt.s32.totalorder %v364, 98
    %v379 = vsel %vm365, 1, 0
    %v380 = vsel %vm366, 1, 0
    %v381 = vsel %vm367, 1, 0
    %v382 = vsel %vm368, 1, 0
    %v383 = vsel %vm369, 1, 0
    %v384 = vsel %vm370, 1, 0
    %v385 = vsel %vm371, 1, 0
    %v386 = vsel %vm372, 1, 0
    %v387 = vsel %vm373, 1, 0
    %v388 = vsel %vm374, 1, 0
    %v389 = vsel %vm375, 1, 0
    %v390 = vsel %vm376, 1, 0
    %v391 = vsel %vm377, 1, 0
    %v392 = vsel %vm378, 1, 0
    %vm393 = vcmp.eq.s32.totalorder %v379, 1
    %vm394 = vcmp.eq.s32.totalorder %v380, 1
    %vm395 = vcmp.eq.s32.totalorder %v381, 1
    %vm396 = vcmp.eq.s32.totalorder %v382, 1
    %vm397 = vcmp.eq.s32.totalorder %v383, 1
    %vm398 = vcmp.eq.s32.totalorder %v384, 1
    %vm399 = vcmp.eq.s32.totalorder %v385, 1
    %vm400 = vcmp.eq.s32.totalorder %v386, 1
    %vm401 = vcmp.eq.s32.totalorder %v387, 1
    %vm402 = vcmp.eq.s32.totalorder %v388, 1
    %vm403 = vcmp.eq.s32.totalorder %v389, 1
    %vm404 = vcmp.eq.s32.totalorder %v390, 1
    %vm405 = vcmp.eq.s32.totalorder %v391, 1
    %vm406 = vcmp.eq.s32.totalorder %v392, 1
    %v407 = vsel %vm393, %v203, 0.0
    %v408 = vsel %vm394, %v206, 0.0
    %v409 = vsel %vm395, %v211, 0.0
    %v410 = vsel %vm396, %v214, 0.0
    %v411 = vsel %vm397, %v219, 0.0
    %v412 = vsel %vm398, %v222, 0.0
    %v413 = vsel %vm399, %v227, 0.0
    %v414 = vsel %vm400, %v230, 0.0
    %v415 = vsel %vm401, %v235, 0.0
    %v416 = vsel %vm402, %v238, 0.0
    %v417 = vsel %vm403, %v243, 0.0
    %v418 = vsel %vm404, %v246, 0.0
    %v419 = vsel %vm405, %v251, 0.0
    %v420 = vsel %vm406, %v254, 0.0
    %v421 = vld [vmem:[#allocation4] sm:$0x1]
    %v422 = vadd.f32 %v407, %v408
    %v423 = vadd.f32 %v422, %v409
    %v424 = vadd.f32 %v423, %v410
    %v425 = vadd.f32 %v424, %v411
    %v426 = vadd.f32 %v425, %v412
    %v427 = vadd.f32 %v426, %v413
    %v428 = vadd.f32 %v427, %v414
    %v429 = vadd.f32 %v428, %v415
    %v430 = vadd.f32 %v429, %v416
    %v431 = vadd.f32 %v430, %v417
    %v432 = vadd.f32 %v431, %v418
    %v433 = vadd.f32 %v432, %v419
    %v434 = vadd.f32 %v433, %v420
    %v435 = vrot.slane %v434, 4
    %v436 = vadd.f32 %v434, %v435
    %v437 = vrot.slane %v436, 2
    %v438 = vadd.f32 %v436, %v437
    %v439 = vrot.slane %v438, 1
    %v440 = vadd.f32 %v438, %v439
    %v441 = vadd.f32 %v421, %v440
    %442 = vst [vmem:[#allocation4] sm:$0x1] %v441
    %v443 = vld [vmem:[#allocation6] sm:$0x1]
    %v444 = vmul.f32 %v407, %v407
    %v445 = vmul.f32 %v408, %v408
    %v446 = vmul.f32 %v409, %v409
    %v447 = vmul.f32 %v410, %v410
    %v448 = vmul.f32 %v411, %v411
    %v449 = vmul.f32 %v412, %v412
    %v450 = vmul.f32 %v413, %v413
    %v451 = vmul.f32 %v414, %v414
    %v452 = vmul.f32 %v415, %v415
    %v453 = vmul.f32 %v416, %v416
    %v454 = vmul.f32 %v417, %v417
    %v455 = vmul.f32 %v418, %v418
    %v456 = vmul.f32 %v419, %v419
    %v457 = vmul.f32 %v420, %v420
    %v458 = vadd.f32 %v444, %v445
    %v459 = vadd.f32 %v458, %v446
    %v460 = vadd.f32 %v459, %v447
    %v461 = vadd.f32 %v460, %v448
    %v462 = vadd.f32 %v461, %v449
    %v463 = vadd.f32 %v462, %v450
    %v464 = vadd.f32 %v463, %v451
    %v465 = vadd.f32 %v464, %v452
    %v466 = vadd.f32 %v465, %v453
    %v467 = vadd.f32 %v466, %v454
    %v468 = vadd.f32 %v467, %v455
    %v469 = vadd.f32 %v468, %v456
    %v470 = vadd.f32 %v469, %v457
    %v471 = vrot.slane %v470, 4
    %v472 = vadd.f32 %v470, %v471
    %v473 = vrot.slane %v472, 2
    %v474 = vadd.f32 %v472, %v473
    %v475 = vrot.slane %v474, 1
    %v476 = vadd.f32 %v474, %v475
    %v477 = vadd.f32 %v443, %v476
    %478 = vst [vmem:[#allocation6] sm:$0x1] %v477
    // Predicated region
    $region14: #{tpu_custom_call.1} parent=1 // pred_check
      _
    $region15: #{tpu_custom_call.1} parent=1 // pred_check_branch
      %480 = sbr.rel (0) target = $region17
    $region16: #{tpu_custom_call.1} parent=1 // pred_region
      %s481 = sadd.s32 0, 0
      %p482 = scmp.lt.s32.totalorder %s481, 0
      %s483 = scalar_select %p482, %s481, 0
      %s484 = smul.u32 14, %s483
      %s485 = ssub.s32 13, %s484
      %s486 = smul.u32 64, %s485
      %s488 = ssub.s32 896, %s486
      %489 = vsyncadd [#allocation3], %s488
      %p490 = scmp.ne.s32.totalorder 0, %s486
      %s491 = smul.addr %s484, 64
      %s492 = scalar_lea.hbm %s2, %s491
      %s493 = smul.u32 4, %s485
      %s494 = sshll.u32 [#allocation2], 4
      %s495 = int_to_ptr.vmem [resolvable:$true] %s494
      %s496 = sshll.u32 %s493, 4
      %500 = dma.vmem_to_hbm [thread:$0]  (%p490), %s495, %s496, %s492, [#allocation3], 64, 64, 4
    $region17: #{tpu_custom_call.1} parent=1 // pred_fallthru
      _
    // Predicated region
    $region18: #{tpu_custom_call.1} parent=1 // pred_check
      _
    $region19: #{tpu_custom_call.1} parent=1 // pred_check_branch
      %502 = sbr.rel (0) target = $region21
    $region20: #{tpu_custom_call.1} parent=1 // pred_region
      %s504 = ssub.s32 16, 16
      %505 = vsyncadd [#allocation5], %s504
      %s507 = sshll.u32 [#allocation4], 4
      %s508 = int_to_ptr.vmem [resolvable:$true] %s507
      %510 = dma.vmem_to_hbm [thread:$0]  %s508, 16, %s3, [#allocation5]
    $region21: #{tpu_custom_call.1} parent=1 // pred_fallthru
      _
    // Predicated region
    $region22: #{tpu_custom_call.1} parent=1 // pred_check
      _
    $region23: #{tpu_custom_call.1} parent=1 // pred_check_branch
      %512 = sbr.rel (0) target = $region25
    $region24: #{tpu_custom_call.1} parent=1 // pred_region
      %s514 = ssub.s32 16, 16
      %515 = vsyncadd [#allocation5], %s514
      %s517 = sshll.u32 [#allocation6], 4
      %s518 = int_to_ptr.vmem [resolvable:$true] %s517
      %520 = dma.vmem_to_hbm [thread:$0]  %s518, 16, %s4, [#allocation5]
    $region25: #{tpu_custom_call.1} parent=1 // pred_fallthru
      _
    // Predicated region
    $region26: #{tpu_custom_call.1} parent=1 // pred_check
      _
    $region27: #{tpu_custom_call.1} parent=1 // pred_check_branch
      %522 = sbr.rel (0) target = $region29
    $region28: #{tpu_custom_call.1} parent=1 // pred_region
      %523 = dma.done [#allocation3], 896
    $region29: #{tpu_custom_call.1} parent=1 // pred_fallthru
      _
    // Predicated region
    $region30: #{tpu_custom_call.1} parent=1 // pred_check
      _
    $region31: #{tpu_custom_call.1} parent=1 // pred_check_branch
      %525 = sbr.rel (0) target = $region33
    $region32: #{tpu_custom_call.1} parent=1 // pred_region
      %526 = dma.done [#allocation5], 16
    $region33: #{tpu_custom_call.1} parent=1 // pred_fallthru
      _
    // Predicated region
    $region34: #{tpu_custom_call.1} parent=1 // pred_check
      _
    $region35: #{tpu_custom_call.1} parent=1 // pred_check_branch
      %528 = sbr.rel (0) target = $region37
    $region36: #{tpu_custom_call.1} parent=1 // pred_region
      %529 = dma.done [#allocation5], 16
    $region37: #{tpu_custom_call.1} parent=1 // pred_fallthru
      _
    %530 = vsyncpa [#allocation3], 1
    %531 = vsyncpa [#allocation5], 1

</llo_original>
